<compile_context>
chip_gen: v7x
topology: tpu7x:2x2x1
jax: 0.10.0
libtpu: 0.0.40
codegen_flags: <defaults>
</compile_context>

<pallas_src>
import functools

import jax
import jax.numpy as jnp
from jax.experimental import pallas as pl
from jax.experimental.pallas import tpu as pltpu

LANE = 128


# ----------------------------- Pallas kernels --------------------------------
def _gcn_kernel(apply_relu, a_ref, vfull_ref, vtile_ref, deg_ref, w_ref, b_ref, o_ref):
    """One GCNConv layer on a row tile (aggregate-then-project).

    vfull / vtile are the D^{-1/2}-pre-scaled activations (full array / this row tile).
    A_hat @ v for this tile = dinv * (A_raw @ (dinv*v) + (dinv*v)_tile)
    (self-loop folded in; the normalized adjacency is never materialized).
    """
    a = a_ref[...].astype(jnp.float32)                 # (TM, N) bf16 -> f32 (exact)
    dinv = deg_ref[...][:, 0:1]                        # (TM, 1)
    agg = dinv * (jnp.dot(a, vfull_ref[...], preferred_element_type=jnp.float32)
                  + vtile_ref[...])
    out = jnp.dot(agg, w_ref[...], preferred_element_type=jnp.float32) + b_ref[...]
    if apply_relu:
        out = jnp.maximum(out, 0.0)
    o_ref[...] = out


def _sage_kernel(a_ref, hfull_ref, htile_ref, deg_ref, wl_ref, wr_ref, b_ref, o_ref):
    """SAGEConv (mean aggregation) + ReLU on a row tile.

    Output is pre-scaled by D^{-1/2} so the following GCN layer consumes it directly.
    """
    a = a_ref[...].astype(jnp.float32)                 # (TM, N) bf16 -> f32 (exact)
    deg = deg_ref[...]
    dinv, inv_indeg = deg[:, 0:1], deg[:, 1:2]
    mean_agg = inv_indeg * jnp.dot(a, hfull_ref[...], preferred_element_type=jnp.float32)
    h2 = (jnp.dot(mean_agg, wl_ref[...], preferred_element_type=jnp.float32)
          + jnp.dot(htile_ref[...], wr_ref[...], preferred_element_type=jnp.float32)
          + b_ref[...])
    o_ref[...] = dinv * jnp.maximum(h2, 0.0)


# --------------------------- layer wrappers -----------------------------------
def _tiling(n):
    n8 = ((n + 7) // 8) * 8
    tm = n8 if n8 <= 256 else 256          # >=256 feeds the 256x256 MXU; multiple of 8
    n_pad = ((n + tm - 1) // tm) * tm
    return n_pad, tm


def _vmem_limit(per_step_bytes):
    try:
        cap = int(pltpu.get_tpu_info().vmem_capacity_bytes)
    except Exception:
        cap = 64 << 20                      # conservative fallback (v7x physical VMEM)
    want = int(per_step_bytes) + (8 << 20)  # headroom for vregs / compiler temporaries
    return int(max(min(want, cap - (8 << 20)), 32 << 20))


def _layer_buffers_bytes(tm, n_pad, c_in, c_out):
    a_tile = tm * n_pad
    return (2 * a_tile * 2                       # bf16 A row tile, double buffered
            + a_tile * 4                         # in-kernel f32 upcast of the A tile
            + n_pad * c_in * 4                   # resident full activation
            + 2 * tm * c_in * 4                  # tiled activation
            + 2 * tm * 2 * 4                     # degree tile
            + 2 * (2 * c_in + 1) * c_out * 4     # weights + bias (generous)
            + 2 * tm * c_out * 4                 # output tile
            + 4 * tm * max(c_in, c_out) * 4)     # temporaries slack


def _gcn_layer(a_bf16, deg, v_scaled, w, b, *, apply_relu, tm):
    n_pad = a_bf16.shape[0]
    c_in = v_scaled.shape[1]
    c_out = w.shape[1]
    cost = pl.CostEstimate(
        flops=2 * n_pad * n_pad * c_in + 2 * n_pad * c_in * c_out,
        transcendentals=0,
        bytes_accessed=n_pad * n_pad * 2
                       + n_pad * (2 * c_in + 2 + c_out) * 4
                       + (c_in + 1) * c_out * 4)
    return pl.pallas_call(
        functools.partial(_gcn_kernel, apply_relu),
        out_shape=jax.ShapeDtypeStruct((n_pad, c_out), jnp.float32),
        grid=(n_pad // tm,),
        in_specs=[
            pl.BlockSpec((tm, n_pad), lambda i: (i, 0)),     # A row tile (bf16)
            pl.BlockSpec((n_pad, c_in), lambda i: (0, 0)),   # scaled activation (full)
            pl.BlockSpec((tm, c_in), lambda i: (i, 0)),      # scaled activation (tile)
            pl.BlockSpec((tm, 2), lambda i: (i, 0)),         # [D^-1/2, 1/indeg] tile
            pl.BlockSpec((c_in, c_out), lambda i: (0, 0)),   # W
            pl.BlockSpec((1, c_out), lambda i: (0, 0)),      # b
        ],
        out_specs=pl.BlockSpec((tm, c_out), lambda i: (i, 0)),
        compiler_params=pltpu.CompilerParams(
            dimension_semantics=("parallel",),
            vmem_limit_bytes=_vmem_limit(_layer_buffers_bytes(tm, n_pad, c_in, c_out))),
        cost_estimate=cost,
    )(a_bf16, v_scaled, v_scaled, deg, w, b)


def _sage_layer(a_bf16, deg, h, wl, wr, b, *, tm):
    n_pad = a_bf16.shape[0]
    hdim = h.shape[1]
    cost = pl.CostEstimate(
        flops=2 * n_pad * n_pad * hdim + 4 * n_pad * hdim * hdim,
        transcendentals=0,
        bytes_accessed=n_pad * n_pad * 2
                       + n_pad * (3 * hdim + 2) * 4
                       + (2 * hdim + 1) * hdim * 4)
    return pl.pallas_call(
        _sage_kernel,
        out_shape=jax.ShapeDtypeStruct((n_pad, hdim), jnp.float32),
        grid=(n_pad // tm,),
        in_specs=[
            pl.BlockSpec((tm, n_pad), lambda i: (i, 0)),     # A row tile (bf16)
            pl.BlockSpec((n_pad, hdim), lambda i: (0, 0)),   # h (full, for aggregation)
            pl.BlockSpec((tm, hdim), lambda i: (i, 0)),      # h (tile, root term)
            pl.BlockSpec((tm, 2), lambda i: (i, 0)),         # [D^-1/2, 1/indeg] tile
            pl.BlockSpec((hdim, hdim), lambda i: (0, 0)),    # W_l (neighbors)
            pl.BlockSpec((hdim, hdim), lambda i: (0, 0)),    # W_r (root)
            pl.BlockSpec((1, hdim), lambda i: (0, 0)),       # b
        ],
        out_specs=pl.BlockSpec((tm, hdim), lambda i: (i, 0)),
        compiler_params=pltpu.CompilerParams(
            dimension_semantics=("parallel",),
            vmem_limit_bytes=_vmem_limit(_layer_buffers_bytes(tm, n_pad, hdim, hdim))),
        cost_estimate=cost,
    )(a_bf16, h, h, deg, wl, wr, b)


# ------------------------------- JAX glue ------------------------------------
def prepare_inputs(x, edge_index):
    """Densify edge_index (edge j->i stored at [i, j]) and precompute degree scalings.

    For a static graph, hoist/cache this outside the per-forward path.
    """
    n, _ = x.shape
    n_pad, tm = _tiling(n)
    src, dst = edge_index[0], edge_index[1]
    a = jnp.zeros((n_pad, n_pad), jnp.float32).at[dst, src].add(1.0)  # no self-loops
    indeg = a.sum(axis=1)
    dinv = jax.lax.rsqrt(indeg + 1.0)            # GCN D^{-1/2} incl. added self-loop
    inv_indeg = 1.0 / jnp.maximum(indeg, 1.0)    # SAGE mean (isolated nodes -> 0 agg)
    deg = jnp.stack([dinv, inv_indeg], axis=1)   # (N_pad, 2)
    x_pad = jnp.pad(x, ((0, n_pad - n), (0, 0)))
    xs = dinv[:, None] * x_pad                   # pre-scaled input for the first GCN
    a_bf16 = a.astype(jnp.bfloat16)              # exact for integer edge counts < 256
    return a_bf16, deg, xs, n_pad, tm


def gnn_routing_forward(x, edge_index, params):
    n = x.shape[0]
    out_c = params["w3"].shape[1]
    a_bf16, deg, xs, _, tm = prepare_inputs(x, edge_index)

    out_pad_c = ((out_c + LANE - 1) // LANE) * LANE    # lane-dense final store
    w3p = jnp.pad(params["w3"], ((0, 0), (0, out_pad_c - out_c)))
    b3p = jnp.pad(params["b3"], ((0, 0), (0, out_pad_c - out_c)))

    # GCNConv(in -> hidden) + ReLU
    h = _gcn_layer(a_bf16, deg, xs, params["w1"], params["b1"], apply_relu=True, tm=tm)
    # SAGEConv(hidden -> hidden) + ReLU (output pre-scaled by D^{-1/2} for next GCN)
    h2s = _sage_layer(a_bf16, deg, h, params["wl"], params["wr"], params["b2"], tm=tm)
    # GCNConv(hidden -> out)
    out = _gcn_layer(a_bf16, deg, h2s, w3p, b3p, apply_relu=False, tm=tm)
    return out[:n, :out_c]


def init_params(key, in_channels, hidden_channels, out_channels):
    ks = jax.random.split(key, 5)

    def glorot(k, shape):
        lim = (6.0 / (shape[0] + shape[1])) ** 0.5
        return jax.random.uniform(k, shape, jnp.float32, -lim, lim)

    return dict(
        w1=glorot(ks[0], (in_channels, hidden_channels)),
        b1=jnp.zeros((1, hidden_channels), jnp.float32),
        wl=glorot(ks[1], (hidden_channels, hidden_channels)),   # SAGE lin_l (neighbors)
        wr=glorot(ks[2], (hidden_channels, hidden_channels)),   # SAGE lin_r (root)
        b2=jnp.zeros((1, hidden_channels), jnp.float32),
        w3=glorot(ks[3], (hidden_channels, out_channels)),
        b3=jnp.zeros((1, out_channels), jnp.float32),
    )


# ------------------------------ reference (JAX) -------------------------------
def _build_adjacencies_ref(edge_index, num_nodes):
    src, dst = edge_index[0], edge_index[1]
    loop = jnp.arange(num_nodes)
    a = jnp.zeros((num_nodes, num_nodes), jnp.float32).at[
        jnp.concatenate([dst, loop]), jnp.concatenate([src, loop])].add(1.0)
    deg = a.sum(axis=1)
    dinv = jnp.where(deg > 0, jax.lax.rsqrt(deg), 0.0)
    a_gcn = dinv[:, None] * a * dinv[None, :]

    a_raw = jnp.zeros((num_nodes, num_nodes), jnp.float32).at[dst, src].add(1.0)
    indeg = a_raw.sum(axis=1)
    a_mean = a_raw / jnp.maximum(indeg, 1.0)[:, None]
    return a_gcn, a_mean


def gnn_routing_ref(x, edge_index, params):
    n = x.shape[0]
    a_gcn, a_mean = _build_adjacencies_ref(edge_index, n)
    h = a_gcn @ (x @ params["w1"]) + params["b1"]
    h = jnp.maximum(h, 0.0)
    h2 = (a_mean @ h) @ params["wl"] + h @ params["wr"] + params["b2"]
    h2 = jnp.maximum(h2, 0.0)
    return a_gcn @ (h2 @ params["w3"]) + params["b3"]


if __name__ == "__main__":
    N_NODES, IN_C, HID_C, OUT_C, N_EDGES = 16, 4, 32, 8, 40

    key = jax.random.PRNGKey(0)
    k_x, k_e, k_p = jax.random.split(key, 3)

    x = jax.random.normal(k_x, (N_NODES, IN_C), jnp.float32)
    edge_index = jax.random.randint(k_e, (2, N_EDGES), 0, N_NODES, jnp.int32)
    params = init_params(k_p, IN_C, HID_C, OUT_C)

    out = jax.jit(gnn_routing_forward)(x, edge_index, params)
    out = jax.block_until_ready(out)

    ref = gnn_routing_ref(x, edge_index, params)
    assert out.shape == (N_NODES, OUT_C)
    assert jnp.allclose(out, ref, atol=1e-4, rtol=1e-4)

    print("KERNEL_OK")
</pallas_src>

<mosaic_0001>
module attributes {stable_mosaic.version = 11 : i64} {
  func.func @_sage_kernel(%arg0: i32, %arg1: memref<16x16xbf16, #tpu.memory_space<vmem>>, %arg2: memref<16x32xf32, #tpu.memory_space<vmem>>, %arg3: memref<16x32xf32, #tpu.memory_space<vmem>>, %arg4: memref<16x2xf32, #tpu.memory_space<vmem>>, %arg5: memref<32x32xf32, #tpu.memory_space<vmem>>, %arg6: memref<32x32xf32, #tpu.memory_space<vmem>>, %arg7: memref<1x32xf32, #tpu.memory_space<vmem>>, %arg8: memref<16x32xf32, #tpu.memory_space<vmem>>) attributes {dimension_semantics = [#tpu.dimension_semantics<parallel>], iteration_bounds = array<i64: 1>, scalar_prefetch = 0 : i64, scratch_operands = 0 : i64, tpu.core_type = #tpu.core_type<tc>, window_params = [{transform_indices = @transform_0, window_bounds = array<i64: 16, 16>}, {pipeline_mode = #tpu.pipeline_mode<synchronous>, transform_indices = @transform_1, window_bounds = array<i64: 16, 32>}, {transform_indices = @transform_2, window_bounds = array<i64: 16, 32>}, {transform_indices = @transform_3, window_bounds = array<i64: 16, 2>}, {pipeline_mode = #tpu.pipeline_mode<synchronous>, transform_indices = @transform_4, window_bounds = array<i64: 32, 32>}, {pipeline_mode = #tpu.pipeline_mode<synchronous>, transform_indices = @transform_5, window_bounds = array<i64: 32, 32>}, {pipeline_mode = #tpu.pipeline_mode<synchronous>, transform_indices = @transform_6, window_bounds = array<i64: 1, 32>}, {transform_indices = @transform_7, window_bounds = array<i64: 16, 32>}]} {
    %c0 = arith.constant 0 : index
    %c0_0 = arith.constant 0 : index
    %0 = vector.load %arg1[%c0, %c0_0] : memref<16x16xbf16, #tpu.memory_space<vmem>>, vector<16x16xbf16>
    %1 = arith.extf %0 : vector<16x16xbf16> to vector<16x16xf32>
    %c0_1 = arith.constant 0 : index
    %c0_2 = arith.constant 0 : index
    %2 = vector.load %arg4[%c0_1, %c0_2] : memref<16x2xf32, #tpu.memory_space<vmem>>, vector<16x2xf32>
    %3 = vector.extract_strided_slice %2 {offsets = [0, 0], sizes = [16, 1], strides = [1, 1]} : vector<16x2xf32> to vector<16x1xf32>
    %4 = vector.extract_strided_slice %2 {offsets = [0, 1], sizes = [16, 1], strides = [1, 1]} : vector<16x2xf32> to vector<16x1xf32>
    %c0_3 = arith.constant 0 : index
    %c0_4 = arith.constant 0 : index
    %5 = vector.load %arg2[%c0_3, %c0_4] : memref<16x32xf32, #tpu.memory_space<vmem>>, vector<16x32xf32>
    %cst = arith.constant dense<0.000000e+00> : vector<16x32xf32>
    %6 = tpu.matmul %1, %5, %cst {dimension_numbers = #tpu.dot_dimension_numbers<[1], [0], [0], [1], [0, 0, 1, 1], [], []>} : vector<16x16xf32>, vector<16x32xf32>, vector<16x32xf32> -> vector<16x32xf32>
    %7 = vector.broadcast %4 : vector<16x1xf32> to vector<16x32xf32>
    %8 = arith.mulf %7, %6 : vector<16x32xf32>
    %c0_5 = arith.constant 0 : index
    %c0_6 = arith.constant 0 : index
    %9 = vector.load %arg5[%c0_5, %c0_6] : memref<32x32xf32, #tpu.memory_space<vmem>>, vector<32x32xf32>
    %cst_7 = arith.constant dense<0.000000e+00> : vector<16x32xf32>
    %10 = tpu.matmul %8, %9, %cst_7 {dimension_numbers = #tpu.dot_dimension_numbers<[1], [0], [0], [1], [0, 0, 1, 1], [], []>} : vector<16x32xf32>, vector<32x32xf32>, vector<16x32xf32> -> vector<16x32xf32>
    %c0_8 = arith.constant 0 : index
    %c0_9 = arith.constant 0 : index
    %11 = vector.load %arg3[%c0_8, %c0_9] : memref<16x32xf32, #tpu.memory_space<vmem>>, vector<16x32xf32>
    %c0_10 = arith.constant 0 : index
    %c0_11 = arith.constant 0 : index
    %12 = vector.load %arg6[%c0_10, %c0_11] : memref<32x32xf32, #tpu.memory_space<vmem>>, vector<32x32xf32>
    %cst_12 = arith.constant dense<0.000000e+00> : vector<16x32xf32>
    %13 = tpu.matmul %11, %12, %cst_12 {dimension_numbers = #tpu.dot_dimension_numbers<[1], [0], [0], [1], [0, 0, 1, 1], [], []>} : vector<16x32xf32>, vector<32x32xf32>, vector<16x32xf32> -> vector<16x32xf32>
    %14 = arith.addf %10, %13 : vector<16x32xf32>
    %c0_13 = arith.constant 0 : index
    %c0_14 = arith.constant 0 : index
    %15 = vector.load %arg7[%c0_13, %c0_14] : memref<1x32xf32, #tpu.memory_space<vmem>>, vector<1x32xf32>
    %16 = vector.broadcast %15 : vector<1x32xf32> to vector<16x32xf32>
    %17 = arith.addf %14, %16 : vector<16x32xf32>
    %cst_15 = arith.constant 0.000000e+00 : f32
    %18 = vector.broadcast %cst_15 : f32 to vector<16x32xf32>
    %19 = arith.maximumf %17, %18 : vector<16x32xf32>
    %20 = vector.broadcast %3 : vector<16x1xf32> to vector<16x32xf32>
    %21 = arith.mulf %20, %19 : vector<16x32xf32>
    %c0_16 = arith.constant 0 : index
    %c0_17 = arith.constant 0 : index
    %22 = vector.load %arg8[%c0_16, %c0_17] : memref<16x32xf32, #tpu.memory_space<vmem>>, vector<16x32xf32>
    tpu.vector_store %arg8[%c0_16, %c0_17], %21 {strides = array<i32>} : memref<16x32xf32, #tpu.memory_space<vmem>>, vector<16x32xf32>,
    return
  }
  func.func @transform_0(%arg0: i32) -> (i32, i32) {
    %c0_i32 = arith.constant 0 : i32
    %c0_i32_0 = arith.constant 0 : i32
    return %arg0, %c0_i32 : i32, i32
  }
  func.func @transform_1(%arg0: i32) -> (i32, i32) {
    %c0_i32 = arith.constant 0 : i32
    %c0_i32_0 = arith.constant 0 : i32
    %c0_i32_1 = arith.constant 0 : i32
    return %c0_i32, %c0_i32_0 : i32, i32
  }
  func.func @transform_2(%arg0: i32) -> (i32, i32) {
    %c0_i32 = arith.constant 0 : i32
    %c0_i32_0 = arith.constant 0 : i32
    return %arg0, %c0_i32 : i32, i32
  }
  func.func @transform_3(%arg0: i32) -> (i32, i32) {
    %c0_i32 = arith.constant 0 : i32
    %c0_i32_0 = arith.constant 0 : i32
    return %arg0, %c0_i32 : i32, i32
  }
  func.func @transform_4(%arg0: i32) -> (i32, i32) {
    %c0_i32 = arith.constant 0 : i32
    %c0_i32_0 = arith.constant 0 : i32
    %c0_i32_1 = arith.constant 0 : i32
    return %c0_i32, %c0_i32_0 : i32, i32
  }
  func.func @transform_5(%arg0: i32) -> (i32, i32) {
    %c0_i32 = arith.constant 0 : i32
    %c0_i32_0 = arith.constant 0 : i32
    %c0_i32_1 = arith.constant 0 : i32
    return %c0_i32, %c0_i32_0 : i32, i32
  }
  func.func @transform_6(%arg0: i32) -> (i32, i32) {
    %c0_i32 = arith.constant 0 : i32
    %c0_i32_0 = arith.constant 0 : i32
    %c0_i32_1 = arith.constant 0 : i32
    return %c0_i32, %c0_i32_0 : i32, i32
  }
  func.func @transform_7(%arg0: i32) -> (i32, i32) {
    %c0_i32 = arith.constant 0 : i32
    %c0_i32_0 = arith.constant 0 : i32
    return %arg0, %c0_i32 : i32, i32
  }
}

module attributes {stable_mosaic.version = 11 : i64} {
  func.func @_gcn_kernel(%arg0: i32, %arg1: memref<16x16xbf16, #tpu.memory_space<vmem>>, %arg2: memref<16x4xf32, #tpu.memory_space<vmem>>, %arg3: memref<16x4xf32, #tpu.memory_space<vmem>>, %arg4: memref<16x2xf32, #tpu.memory_space<vmem>>, %arg5: memref<4x32xf32, #tpu.memory_space<vmem>>, %arg6: memref<1x32xf32, #tpu.memory_space<vmem>>, %arg7: memref<16x32xf32, #tpu.memory_space<vmem>>) attributes {dimension_semantics = [#tpu.dimension_semantics<parallel>], iteration_bounds = array<i64: 1>, scalar_prefetch = 0 : i64, scratch_operands = 0 : i64, tpu.core_type = #tpu.core_type<tc>, window_params = [{transform_indices = @transform_0, window_bounds = array<i64: 16, 16>}, {pipeline_mode = #tpu.pipeline_mode<synchronous>, transform_indices = @transform_1, window_bounds = array<i64: 16, 4>}, {transform_indices = @transform_2, window_bounds = array<i64: 16, 4>}, {transform_indices = @transform_3, window_bounds = array<i64: 16, 2>}, {pipeline_mode = #tpu.pipeline_mode<synchronous>, transform_indices = @transform_4, window_bounds = array<i64: 4, 32>}, {pipeline_mode = #tpu.pipeline_mode<synchronous>, transform_indices = @transform_5, window_bounds = array<i64: 1, 32>}, {transform_indices = @transform_6, window_bounds = array<i64: 16, 32>}]} {
    %c0 = arith.constant 0 : index
    %c0_0 = arith.constant 0 : index
    %0 = vector.load %arg1[%c0, %c0_0] : memref<16x16xbf16, #tpu.memory_space<vmem>>, vector<16x16xbf16>
    %1 = arith.extf %0 : vector<16x16xbf16> to vector<16x16xf32>
    %c0_1 = arith.constant 0 : index
    %c0_2 = arith.constant 0 : index
    %2 = vector.load %arg4[%c0_1, %c0_2] : memref<16x2xf32, #tpu.memory_space<vmem>>, vector<16x2xf32>
    %3 = vector.extract_strided_slice %2 {offsets = [0, 0], sizes = [16, 1], strides = [1, 1]} : vector<16x2xf32> to vector<16x1xf32>
    %c0_3 = arith.constant 0 : index
    %c0_4 = arith.constant 0 : index
    %4 = vector.load %arg2[%c0_3, %c0_4] : memref<16x4xf32, #tpu.memory_space<vmem>>, vector<16x4xf32>
    %cst = arith.constant dense<0.000000e+00> : vector<16x4xf32>
    %5 = tpu.matmul %1, %4, %cst {dimension_numbers = #tpu.dot_dimension_numbers<[1], [0], [0], [1], [0, 0, 1, 1], [], []>} : vector<16x16xf32>, vector<16x4xf32>, vector<16x4xf32> -> vector<16x4xf32>
    %c0_5 = arith.constant 0 : index
    %c0_6 = arith.constant 0 : index
    %6 = vector.load %arg3[%c0_5, %c0_6] : memref<16x4xf32, #tpu.memory_space<vmem>>, vector<16x4xf32>
    %7 = arith.addf %5, %6 : vector<16x4xf32>
    %8 = vector.broadcast %3 : vector<16x1xf32> to vector<16x4xf32>
    %9 = arith.mulf %8, %7 : vector<16x4xf32>
    %c0_7 = arith.constant 0 : index
    %c0_8 = arith.constant 0 : index
    %10 = vector.load %arg5[%c0_7, %c0_8] : memref<4x32xf32, #tpu.memory_space<vmem>>, vector<4x32xf32>
    %cst_9 = arith.constant dense<0.000000e+00> : vector<16x32xf32>
    %11 = tpu.matmul %9, %10, %cst_9 {dimension_numbers = #tpu.dot_dimension_numbers<[1], [0], [0], [1], [0, 0, 1, 1], [], []>} : vector<16x4xf32>, vector<4x32xf32>, vector<16x32xf32> -> vector<16x32xf32>
    %c0_10 = arith.constant 0 : index
    %c0_11 = arith.constant 0 : index
    %12 = vector.load %arg6[%c0_10, %c0_11] : memref<1x32xf32, #tpu.memory_space<vmem>>, vector<1x32xf32>
    %13 = vector.broadcast %12 : vector<1x32xf32> to vector<16x32xf32>
    %14 = arith.addf %11, %13 : vector<16x32xf32>
    %cst_12 = arith.constant 0.000000e+00 : f32
    %15 = vector.broadcast %cst_12 : f32 to vector<16x32xf32>
    %16 = arith.maximumf %14, %15 : vector<16x32xf32>
    %c0_13 = arith.constant 0 : index
    %c0_14 = arith.constant 0 : index
    %17 = vector.load %arg7[%c0_13, %c0_14] : memref<16x32xf32, #tpu.memory_space<vmem>>, vector<16x32xf32>
    tpu.vector_store %arg7[%c0_13, %c0_14], %16 {strides = array<i32>} : memref<16x32xf32, #tpu.memory_space<vmem>>, vector<16x32xf32>,
    return
  }
  func.func @transform_0(%arg0: i32) -> (i32, i32) {
    %c0_i32 = arith.constant 0 : i32
    %c0_i32_0 = arith.constant 0 : i32
    return %arg0, %c0_i32 : i32, i32
  }
  func.func @transform_1(%arg0: i32) -> (i32, i32) {
    %c0_i32 = arith.constant 0 : i32
    %c0_i32_0 = arith.constant 0 : i32
    %c0_i32_1 = arith.constant 0 : i32
    return %c0_i32, %c0_i32_0 : i32, i32
  }
  func.func @transform_2(%arg0: i32) -> (i32, i32) {
    %c0_i32 = arith.constant 0 : i32
    %c0_i32_0 = arith.constant 0 : i32
    return %arg0, %c0_i32 : i32, i32
  }
  func.func @transform_3(%arg0: i32) -> (i32, i32) {
    %c0_i32 = arith.constant 0 : i32
    %c0_i32_0 = arith.constant 0 : i32
    return %arg0, %c0_i32 : i32, i32
  }
  func.func @transform_4(%arg0: i32) -> (i32, i32) {
    %c0_i32 = arith.constant 0 : i32
    %c0_i32_0 = arith.constant 0 : i32
    %c0_i32_1 = arith.constant 0 : i32
    return %c0_i32, %c0_i32_0 : i32, i32
  }
  func.func @transform_5(%arg0: i32) -> (i32, i32) {
    %c0_i32 = arith.constant 0 : i32
    %c0_i32_0 = arith.constant 0 : i32
    %c0_i32_1 = arith.constant 0 : i32
    return %c0_i32, %c0_i32_0 : i32, i32
  }
  func.func @transform_6(%arg0: i32) -> (i32, i32) {
    %c0_i32 = arith.constant 0 : i32
    %c0_i32_0 = arith.constant 0 : i32
    return %arg0, %c0_i32 : i32, i32
  }
}

module attributes {stable_mosaic.version = 11 : i64} {
  func.func @_gcn_kernel(%arg0: i32, %arg1: memref<16x16xbf16, #tpu.memory_space<vmem>>, %arg2: memref<16x32xf32, #tpu.memory_space<vmem>>, %arg3: memref<16x32xf32, #tpu.memory_space<vmem>>, %arg4: memref<16x2xf32, #tpu.memory_space<vmem>>, %arg5: memref<32x128xf32, #tpu.memory_space<vmem>>, %arg6: memref<1x128xf32, #tpu.memory_space<vmem>>, %arg7: memref<16x128xf32, #tpu.memory_space<vmem>>) attributes {dimension_semantics = [#tpu.dimension_semantics<parallel>], iteration_bounds = array<i64: 1>, scalar_prefetch = 0 : i64, scratch_operands = 0 : i64, tpu.core_type = #tpu.core_type<tc>, window_params = [{transform_indices = @transform_0, window_bounds = array<i64: 16, 16>}, {pipeline_mode = #tpu.pipeline_mode<synchronous>, transform_indices = @transform_1, window_bounds = array<i64: 16, 32>}, {transform_indices = @transform_2, window_bounds = array<i64: 16, 32>}, {transform_indices = @transform_3, window_bounds = array<i64: 16, 2>}, {pipeline_mode = #tpu.pipeline_mode<synchronous>, transform_indices = @transform_4, window_bounds = array<i64: 32, 128>}, {pipeline_mode = #tpu.pipeline_mode<synchronous>, transform_indices = @transform_5, window_bounds = array<i64: 1, 128>}, {transform_indices = @transform_6, window_bounds = array<i64: 16, 128>}]} {
    %c0 = arith.constant 0 : index
    %c0_0 = arith.constant 0 : index
    %0 = vector.load %arg1[%c0, %c0_0] : memref<16x16xbf16, #tpu.memory_space<vmem>>, vector<16x16xbf16>
    %1 = arith.extf %0 : vector<16x16xbf16> to vector<16x16xf32>
    %c0_1 = arith.constant 0 : index
    %c0_2 = arith.constant 0 : index
    %2 = vector.load %arg4[%c0_1, %c0_2] : memref<16x2xf32, #tpu.memory_space<vmem>>, vector<16x2xf32>
    %3 = vector.extract_strided_slice %2 {offsets = [0, 0], sizes = [16, 1], strides = [1, 1]} : vector<16x2xf32> to vector<16x1xf32>
    %c0_3 = arith.constant 0 : index
    %c0_4 = arith.constant 0 : index
    %4 = vector.load %arg2[%c0_3, %c0_4] : memref<16x32xf32, #tpu.memory_space<vmem>>, vector<16x32xf32>
    %cst = arith.constant dense<0.000000e+00> : vector<16x32xf32>
    %5 = tpu.matmul %1, %4, %cst {dimension_numbers = #tpu.dot_dimension_numbers<[1], [0], [0], [1], [0, 0, 1, 1], [], []>} : vector<16x16xf32>, vector<16x32xf32>, vector<16x32xf32> -> vector<16x32xf32>
    %c0_5 = arith.constant 0 : index
    %c0_6 = arith.constant 0 : index
    %6 = vector.load %arg3[%c0_5, %c0_6] : memref<16x32xf32, #tpu.memory_space<vmem>>, vector<16x32xf32>
    %7 = arith.addf %5, %6 : vector<16x32xf32>
    %8 = vector.broadcast %3 : vector<16x1xf32> to vector<16x32xf32>
    %9 = arith.mulf %8, %7 : vector<16x32xf32>
    %c0_7 = arith.constant 0 : index
    %c0_8 = arith.constant 0 : index
    %10 = vector.load %arg5[%c0_7, %c0_8] : memref<32x128xf32, #tpu.memory_space<vmem>>, vector<32x128xf32>
    %cst_9 = arith.constant dense<0.000000e+00> : vector<16x128xf32>
    %11 = tpu.matmul %9, %10, %cst_9 {dimension_numbers = #tpu.dot_dimension_numbers<[1], [0], [0], [1], [0, 0, 1, 1], [], []>} : vector<16x32xf32>, vector<32x128xf32>, vector<16x128xf32> -> vector<16x128xf32>
    %c0_10 = arith.constant 0 : index
    %c0_11 = arith.constant 0 : index
    %12 = vector.load %arg6[%c0_10, %c0_11] : memref<1x128xf32, #tpu.memory_space<vmem>>, vector<1x128xf32>
    %13 = vector.broadcast %12 : vector<1x128xf32> to vector<16x128xf32>
    %14 = arith.addf %11, %13 : vector<16x128xf32>
    %c0_12 = arith.constant 0 : index
    %c0_13 = arith.constant 0 : index
    %15 = vector.load %arg7[%c0_12, %c0_13] : memref<16x128xf32, #tpu.memory_space<vmem>>, vector<16x128xf32>
    tpu.vector_store %arg7[%c0_12, %c0_13], %14 {strides = array<i32>} : memref<16x128xf32, #tpu.memory_space<vmem>>, vector<16x128xf32>,
    return
  }
  func.func @transform_0(%arg0: i32) -> (i32, i32) {
    %c0_i32 = arith.constant 0 : i32
    %c0_i32_0 = arith.constant 0 : i32
    return %arg0, %c0_i32 : i32, i32
  }
  func.func @transform_1(%arg0: i32) -> (i32, i32) {
    %c0_i32 = arith.constant 0 : i32
    %c0_i32_0 = arith.constant 0 : i32
    %c0_i32_1 = arith.constant 0 : i32
    return %c0_i32, %c0_i32_0 : i32, i32
  }
  func.func @transform_2(%arg0: i32) -> (i32, i32) {
    %c0_i32 = arith.constant 0 : i32
    %c0_i32_0 = arith.constant 0 : i32
    return %arg0, %c0_i32 : i32, i32
  }
  func.func @transform_3(%arg0: i32) -> (i32, i32) {
    %c0_i32 = arith.constant 0 : i32
    %c0_i32_0 = arith.constant 0 : i32
    return %arg0, %c0_i32 : i32, i32
  }
  func.func @transform_4(%arg0: i32) -> (i32, i32) {
    %c0_i32 = arith.constant 0 : i32
    %c0_i32_0 = arith.constant 0 : i32
    %c0_i32_1 = arith.constant 0 : i32
    return %c0_i32, %c0_i32_0 : i32, i32
  }
  func.func @transform_5(%arg0: i32) -> (i32, i32) {
    %c0_i32 = arith.constant 0 : i32
    %c0_i32_0 = arith.constant 0 : i32
    %c0_i32_1 = arith.constant 0 : i32
    return %c0_i32, %c0_i32_0 : i32, i32
  }
  func.func @transform_6(%arg0: i32) -> (i32, i32) {
    %c0_i32 = arith.constant 0 : i32
    %c0_i32_0 = arith.constant 0 : i32
    return %arg0, %c0_i32 : i32, i32
  }
}

</mosaic_0001>

<llo_original>
// kernel: gnn_routing_forward.3
$region0: #{gnn_routing_forward.3}
  #allocation0 [shape = 'u32[]', space=smem, size = 0x4, offset = 0x4, fixed_abs, tag = 'smem constant byte address 0x4 - core index']
  #allocation1 [shape = 'u32[144,128]{1,0:T(1,128)}', space=vmem, size = 0x12000, scoped, tag = 'internal scratch']
  %s0 = inlined_call_operand.vmem [shape: bf16[16,16], index: 0, kind: input, shape index: {}]
  %s1 = inlined_call_operand.vmem [shape: f32[16,4], index: 1, kind: input, shape index: {}, may-alias: {1,2}]
  %s2 = inlined_call_operand.vmem [shape: f32[16,4], index: 2, kind: input, shape index: {}, may-alias: {1,2}]
  %s3 = inlined_call_operand.vmem [shape: f32[16,2], index: 3, kind: input, shape index: {}]
  %s4 = inlined_call_operand.vmem [shape: f32[4,32], index: 4, kind: input, shape index: {}]
  %s5 = inlined_call_operand.vmem [shape: f32[1,32], index: 5, kind: input, shape index: {}]
  %s6 = inlined_call_operand.vmem [shape: f32[16,32], index: 6, kind: output, shape index: {}]
  %s7 = sld [smem:[#allocation0]]
  $region34: #{gnn_routing_forward.3} parent=0
    _
  %s9 = ssub.s32 1, %s7
  %s10 = scalar_select 0, %s9, %s7
  // Predicated region
  $region2: #{gnn_routing_forward.3} parent=0 // pred_check
    _
  $region3: #{gnn_routing_forward.3} parent=0 // pred_check_branch
    %12 = sbr.rel (0) target = $region5
  $region4: #{gnn_routing_forward.3} parent=0 // pred_region
    _
  $region5: #{gnn_routing_forward.3} parent=0 // pred_fallthru
    _
  // Predicated region
  $region6: #{gnn_routing_forward.3} parent=0 // pred_check
    _
  $region7: #{gnn_routing_forward.3} parent=0 // pred_check_branch
    %14 = sbr.rel (0) target = $region9
  $region8: #{gnn_routing_forward.3} parent=0 // pred_region
    _
  $region9: #{gnn_routing_forward.3} parent=0 // pred_fallthru
    _
  // Predicated region
  $region10: #{gnn_routing_forward.3} parent=0 // pred_check
    _
  $region11: #{gnn_routing_forward.3} parent=0 // pred_check_branch
    %16 = sbr.rel (0) target = $region13
  $region12: #{gnn_routing_forward.3} parent=0 // pred_region
    _
  $region13: #{gnn_routing_forward.3} parent=0 // pred_fallthru
    _
  // Predicated region
  $region14: #{gnn_routing_forward.3} parent=0 // pred_check
    _
  $region15: #{gnn_routing_forward.3} parent=0 // pred_check_branch
    %18 = sbr.rel (0) target = $region17
  $region16: #{gnn_routing_forward.3} parent=0 // pred_region
    _
  $region17: #{gnn_routing_forward.3} parent=0 // pred_fallthru
    _
  // Predicated region
  $region18: #{gnn_routing_forward.3} parent=0 // pred_check
    _
  $region19: #{gnn_routing_forward.3} parent=0 // pred_check_branch
    %20 = sbr.rel (0) target = $region21
  $region20: #{gnn_routing_forward.3} parent=0 // pred_region
    _
  $region21: #{gnn_routing_forward.3} parent=0 // pred_fallthru
    _
  // Predicated region
  $region22: #{gnn_routing_forward.3} parent=0 // pred_check
    _
  $region23: #{gnn_routing_forward.3} parent=0 // pred_check_branch
    %22 = sbr.rel (0) target = $region25
  $region24: #{gnn_routing_forward.3} parent=0 // pred_region
    _
  $region25: #{gnn_routing_forward.3} parent=0 // pred_fallthru
    _
  %v23 = vld [vmem:[%s0] sm:$0xf]
  %v24 = vld [vmem:[%s0 + $0x4] sm:$0xf]
  %v25 = vunpack.c.l.bf16 %v23
  %v26 = vunpack.c.l.bf16 %v24
  %v27 = vld [vmem:[%s3] sm:$0xff]
  %v28 = vld [vmem:[%s3 + $0x8] sm:$0xff]
  %v29 = vld [vmem:[%s1] sm:$0xff]
  %v30 = vld [vmem:[%s1 + $0x8] sm:$0xff]
  %v31 = vld [vmem:[%s2] sm:$0xff]
  %v32 = vld [vmem:[%s2 + $0x8] sm:$0xff]
  %vm33 = vcmask 130048
  %v35 = vsel %vm33, %v25, 0
  %v38 = vsel %vm33, %v26, 0
  %40 = vmatprep.subr.mxu0 0.0
  %41 = vmatpush1.msra.mxu0 %v29
  %42 = vmatprep.subr.mxu0 0.0
  %43 = vmatpush1.msra.mxu0 %v30
  %44 = vmatprep.subr.mxu0 0.0
  %45 = vmatpush1.msra.mxu0 0.0
  %46 = vmatprep.subr.mxu0 0.0
  %47 = vmatpush1.msra.mxu0 0.0
  %48 = vmatprep.subr.mxu0 0.0
  %49 = vmatpush1.msra.mxu0 0.0
  %50 = vmatprep.subr.mxu0 0.0
  %51 = vmatpush1.msra.mxu0 0.0
  %52 = vmatprep.subr.mxu0 0.0
  %53 = vmatpush1.msra.mxu0 0.0
  %54 = vmatprep.subr.mxu0 0.0
  %55 = vmatpush1.msra.mxu0 0.0
  %56 = vmatprep.subr.mxu0 0.0
  %57 = vmatpush1.msra.mxu0 0.0
  %58 = vmatprep.subr.mxu0 0.0
  %59 = vmatpush1.msra.mxu0 0.0
  %60 = vmatprep.subr.mxu0 0.0
  %61 = vmatpush1.msra.mxu0 0.0
  %62 = vmatprep.subr.mxu0 0.0
  %63 = vmatpush1.msra.mxu0 0.0
  %64 = vmatprep.subr.mxu0 0.0
  %65 = vmatpush1.msra.mxu0 0.0
  %66 = vmatprep.subr.mxu0 0.0
  %67 = vmatpush1.msra.mxu0 0.0
  %68 = vmatprep.subr.mxu0 0.0
  %69 = vmatpush1.msra.mxu0 0.0
  %70 = vmatprep.subr.mxu0 0.0
  %71 = vmatpush1.msra.mxu0 0.0
  %72 = vmatprep.subr.mxu0 0.0
  %73 = vmatpush1.msra.mxu0 0.0
  %74 = vmatprep.subr.mxu0 0.0
  %75 = vmatpush1.msra.mxu0 0.0
  %76 = vmatprep.subr.mxu0 0.0
  %77 = vmatpush1.msra.mxu0 0.0
  %78 = vmatprep.subr.mxu0 0.0
  %79 = vmatpush1.msra.mxu0 0.0
  %80 = vmatprep.subr.mxu0 0.0
  %81 = vmatpush1.msra.mxu0 0.0
  %82 = vmatprep.subr.mxu0 0.0
  %83 = vmatpush1.msra.mxu0 0.0
  %84 = vmatprep.subr.mxu0 0.0
  %85 = vmatpush1.msra.mxu0 0.0
  %86 = vmatprep.subr.mxu0 0.0
  %87 = vmatpush1.msra.mxu0 0.0
  %88 = vmatprep.subr.mxu0 0.0
  %89 = vmatpush1.msra.mxu0 0.0
  %90 = vmatprep.subr.mxu0 0.0
  %91 = vmatpush1.msra.mxu0 0.0
  %92 = vmatprep.subr.mxu0 0.0
  %93 = vmatpush1.msra.mxu0 0.0
  %94 = vmatprep.subr.mxu0 0.0
  %95 = vmatpush1.msra.mxu0 0.0
  %96 = vmatprep.subr.mxu0 0.0
  %97 = vmatpush1.msra.mxu0 0.0
  %98 = vmatprep.subr.mxu0 0.0
  %99 = vmatpush1.msra.mxu0 0.0
  %100 = vmatprep.subr.mxu0 0.0
  %101 = vmatpush1.msra.mxu0 0.0
  %102 = vmatprep.subr.mxu0 0.0
  %103 = vmatpush1.msra.mxu0 0.0
  %104 = vmatprep.mubr.f32.mxu0 0.0
  %105 = vmatmul.mubr.f32.gmra.mrb[0].mxu0 %v35
  %v106 = vpop.f32.mrb[0].mxu0
  %v107 = vadd.f32 %v31, %v106
  %v108 = vpop.f32.mrb[0].mxu0
  %109 = vmatprep.mubr.f32.mxu0 0.0
  %110 = vmatmul.mubr.f32.gmra.mrb[0].mxu0 %v38
  %v111 = vpop.f32.mrb[0].mxu0
  %v112 = vadd.f32 %v32, %v111
  %v113 = vpop.f32.mrb[0].mxu0
  %114 = vdwg.mxu0
  %116 = vset.pattern.permute.xlu0 0
  %117 = vperm.xlu0 %116, %v27
  %v118 = vpop.permute.xlu0 %117
  %121 = vset.pattern.permute.xlu0 0
  %122 = vperm.xlu0 %121, %v28
  %v123 = vpop.permute.xlu0 %122
  %v125 = vmul.f32 %v118, %v107
  %v126 = vmul.f32 %v123, %v112
  %v127 = vld [vmem:[%s4] sm:$0xf]
  %v128 = vld [vmem:[%s5] sm:$0x1]
  %v130 = vlaneseq
  %v131 = vshrl.u32 %v130, 7
  %v132 = vsub.s32 0, %v131
  %v133 = vrot.slane %v128, %v132
  %vm135 = vcmask 31744
  %v137 = vsel %vm135, %v125, 0
  %v140 = vsel %vm135, %v126, 0
  %vm142 = vcmask 1043456
  %v144 = vsel %vm142, %v127, 0
  %146 = vmatprep.subr.mxu0 0.0
  %147 = vmatpush1.msra.mxu0 %v144
  %148 = vmatprep.subr.mxu0 0.0
  %149 = vmatpush1.msra.mxu0 0.0
  %150 = vmatprep.subr.mxu0 0.0
  %151 = vmatpush1.msra.mxu0 0.0
  %152 = vmatprep.subr.mxu0 0.0
  %153 = vmatpush1.msra.mxu0 0.0
  %154 = vmatprep.subr.mxu0 0.0
  %155 = vmatpush1.msra.mxu0 0.0
  %156 = vmatprep.subr.mxu0 0.0
  %157 = vmatpush1.msra.mxu0 0.0
  %158 = vmatprep.subr.mxu0 0.0
  %159 = vmatpush1.msra.mxu0 0.0
  %160 = vmatprep.subr.mxu0 0.0
  %161 = vmatpush1.msra.mxu0 0.0
  %162 = vmatprep.subr.mxu0 0.0
  %163 = vmatpush1.msra.mxu0 0.0
  %164 = vmatprep.subr.mxu0 0.0
  %165 = vmatpush1.msra.mxu0 0.0
  %166 = vmatprep.subr.mxu0 0.0
  %167 = vmatpush1.msra.mxu0 0.0
  %168 = vmatprep.subr.mxu0 0.0
  %169 = vmatpush1.msra.mxu0 0.0
  %170 = vmatprep.subr.mxu0 0.0
  %171 = vmatpush1.msra.mxu0 0.0
  %172 = vmatprep.subr.mxu0 0.0
  %173 = vmatpush1.msra.mxu0 0.0
  %174 = vmatprep.subr.mxu0 0.0
  %175 = vmatpush1.msra.mxu0 0.0
  %176 = vmatprep.subr.mxu0 0.0
  %177 = vmatpush1.msra.mxu0 0.0
  %178 = vmatprep.subr.mxu0 0.0
  %179 = vmatpush1.msra.mxu0 0.0
  %180 = vmatprep.subr.mxu0 0.0
  %181 = vmatpush1.msra.mxu0 0.0
  %182 = vmatprep.subr.mxu0 0.0
  %183 = vmatpush1.msra.mxu0 0.0
  %184 = vmatprep.subr.mxu0 0.0
  %185 = vmatpush1.msra.mxu0 0.0
  %186 = vmatprep.subr.mxu0 0.0
  %187 = vmatpush1.msra.mxu0 0.0
  %188 = vmatprep.subr.mxu0 0.0
  %189 = vmatpush1.msra.mxu0 0.0
  %190 = vmatprep.subr.mxu0 0.0
  %191 = vmatpush1.msra.mxu0 0.0
  %192 = vmatprep.subr.mxu0 0.0
  %193 = vmatpush1.msra.mxu0 0.0
  %194 = vmatprep.subr.mxu0 0.0
  %195 = vmatpush1.msra.mxu0 0.0
  %196 = vmatprep.subr.mxu0 0.0
  %197 = vmatpush1.msra.mxu0 0.0
  %198 = vmatprep.subr.mxu0 0.0
  %199 = vmatpush1.msra.mxu0 0.0
  %200 = vmatprep.subr.mxu0 0.0
  %201 = vmatpush1.msra.mxu0 0.0
  %202 = vmatprep.subr.mxu0 0.0
  %203 = vmatpush1.msra.mxu0 0.0
  %204 = vmatprep.subr.mxu0 0.0
  %205 = vmatpush1.msra.mxu0 0.0
  %206 = vmatprep.subr.mxu0 0.0
  %207 = vmatpush1.msra.mxu0 0.0
  %208 = vmatprep.subr.mxu0 0.0
  %209 = vmatpush1.msra.mxu0 0.0
  %210 = vmatprep.mubr.f32.mxu0 0.0
  %211 = vmatmul.mubr.f32.gmra.mrb[0].mxu0 %v137
  %v212 = vpop.f32.mrb[0].mxu0
  %v213 = vadd.f32 %v133, %v212
  %v214 = vpop.f32.mrb[0].mxu0
  %215 = vmatprep.mubr.f32.mxu0 0.0
  %216 = vmatmul.mubr.f32.gmra.mrb[0].mxu0 %v140
  %v217 = vpop.f32.mrb[0].mxu0
  %v218 = vadd.f32 %v133, %v217
  %v219 = vpop.f32.mrb[0].mxu0
  %220 = vdwg.mxu0
  %v221 = vmax.f32 %v213, 0.0
  %v222 = vmax.f32 %v218, 0.0
  %vm223 = vcmask 261120
  %224 = vst.msk [vmem:[%s6] sm:$0xff] %vm223, %v221
  %225 = vst.msk [vmem:[%s6 + $0x8] sm:$0xff] %vm223, %v222
  // Predicated region
  $region26: #{gnn_routing_forward.3} parent=0 // pred_check
    _
  $region27: #{gnn_routing_forward.3} parent=0 // pred_check_branch
    %227 = sbr.rel (0) target = $region29
  $region28: #{gnn_routing_forward.3} parent=0 // pred_region
    _
  $region29: #{gnn_routing_forward.3} parent=0 // pred_fallthru
    _
  // Predicated region
  $region30: #{gnn_routing_forward.3} parent=0 // pred_check
    _
  $region31: #{gnn_routing_forward.3} parent=0 // pred_check_branch
    %229 = sbr.rel (0) target = $region33
  $region32: #{gnn_routing_forward.3} parent=0 // pred_region
    _
  $region33: #{gnn_routing_forward.3} parent=0 // pred_fallthru
    _

// kernel: gnn_routing_forward.4
$region0: #{gnn_routing_forward.4}
  #allocation0 [shape = 'u32[]', space=smem, size = 0x4, offset = 0x4, fixed_abs, tag = 'smem constant byte address 0x4 - core index']
  #allocation1 [shape = 'u32[144,128]{1,0:T(1,128)}', space=vmem, size = 0x12000, scoped, tag = 'internal scratch']
  %s0 = inlined_call_operand.vmem [shape: bf16[16,16], index: 0, kind: input, shape index: {}]
  %s1 = inlined_call_operand.vmem [shape: f32[16,32], index: 1, kind: input, shape index: {}, may-alias: {1,2}]
  %s2 = inlined_call_operand.vmem [shape: f32[16,32], index: 2, kind: input, shape index: {}, may-alias: {1,2}]
  %s3 = inlined_call_operand.vmem [shape: f32[16,2], index: 3, kind: input, shape index: {}]
  %s4 = inlined_call_operand.vmem [shape: f32[32,32], index: 4, kind: input, shape index: {}]
  %s5 = inlined_call_operand.vmem [shape: f32[32,32], index: 5, kind: input, shape index: {}]
  %s6 = inlined_call_operand.vmem [shape: f32[1,32], index: 6, kind: input, shape index: {}]
  %s7 = inlined_call_operand.vmem [shape: f32[16,32], index: 7, kind: output, shape index: {}]
  %s8 = sld [smem:[#allocation0]]
  $region38: #{gnn_routing_forward.4} parent=0
    _
  %s10 = ssub.s32 1, %s8
  %s11 = scalar_select 0, %s10, %s8
  // Predicated region
  $region2: #{gnn_routing_forward.4} parent=0 // pred_check
    _
  $region3: #{gnn_routing_forward.4} parent=0 // pred_check_branch
    %13 = sbr.rel (0) target = $region5
  $region4: #{gnn_routing_forward.4} parent=0 // pred_region
    _
  $region5: #{gnn_routing_forward.4} parent=0 // pred_fallthru
    _
  // Predicated region
  $region6: #{gnn_routing_forward.4} parent=0 // pred_check
    _
  $region7: #{gnn_routing_forward.4} parent=0 // pred_check_branch
    %15 = sbr.rel (0) target = $region9
  $region8: #{gnn_routing_forward.4} parent=0 // pred_region
    _
  $region9: #{gnn_routing_forward.4} parent=0 // pred_fallthru
    _
  // Predicated region
  $region10: #{gnn_routing_forward.4} parent=0 // pred_check
    _
  $region11: #{gnn_routing_forward.4} parent=0 // pred_check_branch
    %17 = sbr.rel (0) target = $region13
  $region12: #{gnn_routing_forward.4} parent=0 // pred_region
    _
  $region13: #{gnn_routing_forward.4} parent=0 // pred_fallthru
    _
  // Predicated region
  $region14: #{gnn_routing_forward.4} parent=0 // pred_check
    _
  $region15: #{gnn_routing_forward.4} parent=0 // pred_check_branch
    %19 = sbr.rel (0) target = $region17
  $region16: #{gnn_routing_forward.4} parent=0 // pred_region
    _
  $region17: #{gnn_routing_forward.4} parent=0 // pred_fallthru
    _
  // Predicated region
  $region18: #{gnn_routing_forward.4} parent=0 // pred_check
    _
  $region19: #{gnn_routing_forward.4} parent=0 // pred_check_branch
    %21 = sbr.rel (0) target = $region21
  $region20: #{gnn_routing_forward.4} parent=0 // pred_region
    _
  $region21: #{gnn_routing_forward.4} parent=0 // pred_fallthru
    _
  // Predicated region
  $region22: #{gnn_routing_forward.4} parent=0 // pred_check
    _
  $region23: #{gnn_routing_forward.4} parent=0 // pred_check_branch
    %23 = sbr.rel (0) target = $region25
  $region24: #{gnn_routing_forward.4} parent=0 // pred_region
    _
  $region25: #{gnn_routing_forward.4} parent=0 // pred_fallthru
    _
  // Predicated region
  $region26: #{gnn_routing_forward.4} parent=0 // pred_check
    _
  $region27: #{gnn_routing_forward.4} parent=0 // pred_check_branch
    %25 = sbr.rel (0) target = $region29
  $region28: #{gnn_routing_forward.4} parent=0 // pred_region
    _
  $region29: #{gnn_routing_forward.4} parent=0 // pred_fallthru
    _
  %v26 = vld [vmem:[%s0] sm:$0xf]
  %v27 = vld [vmem:[%s0 + $0x4] sm:$0xf]
  %v28 = vunpack.c.l.bf16 %v26
  %v29 = vunpack.c.l.bf16 %v27
  %v30 = vld [vmem:[%s3] sm:$0xff]
  %v31 = vld [vmem:[%s3 + $0x8] sm:$0xff]
  %v32 = vld [vmem:[%s1] sm:$0xff]
  %v33 = vld [vmem:[%s1 + $0x8] sm:$0xff]
  %vm34 = vcmask 130048
  %v36 = vsel %vm34, %v28, 0
  %v39 = vsel %vm34, %v29, 0
  %41 = vmatprep.subr.mxu0 0.0
  %42 = vmatpush1.msra.mxu0 %v32
  %43 = vmatprep.subr.mxu0 0.0
  %44 = vmatpush1.msra.mxu0 %v33
  %45 = vmatprep.subr.mxu0 0.0
  %46 = vmatpush1.msra.mxu0 0.0
  %47 = vmatprep.subr.mxu0 0.0
  %48 = vmatpush1.msra.mxu0 0.0
  %49 = vmatprep.subr.mxu0 0.0
  %50 = vmatpush1.msra.mxu0 0.0
  %51 = vmatprep.subr.mxu0 0.0
  %52 = vmatpush1.msra.mxu0 0.0
  %53 = vmatprep.subr.mxu0 0.0
  %54 = vmatpush1.msra.mxu0 0.0
  %55 = vmatprep.subr.mxu0 0.0
  %56 = vmatpush1.msra.mxu0 0.0
  %57 = vmatprep.subr.mxu0 0.0
  %58 = vmatpush1.msra.mxu0 0.0
  %59 = vmatprep.subr.mxu0 0.0
  %60 = vmatpush1.msra.mxu0 0.0
  %61 = vmatprep.subr.mxu0 0.0
  %62 = vmatpush1.msra.mxu0 0.0
  %63 = vmatprep.subr.mxu0 0.0
  %64 = vmatpush1.msra.mxu0 0.0
  %65 = vmatprep.subr.mxu0 0.0
  %66 = vmatpush1.msra.mxu0 0.0
  %67 = vmatprep.subr.mxu0 0.0
  %68 = vmatpush1.msra.mxu0 0.0
  %69 = vmatprep.subr.mxu0 0.0
  %70 = vmatpush1.msra.mxu0 0.0
  %71 = vmatprep.subr.mxu0 0.0
  %72 = vmatpush1.msra.mxu0 0.0
  %73 = vmatprep.subr.mxu0 0.0
  %74 = vmatpush1.msra.mxu0 0.0
  %75 = vmatprep.subr.mxu0 0.0
  %76 = vmatpush1.msra.mxu0 0.0
  %77 = vmatprep.subr.mxu0 0.0
  %78 = vmatpush1.msra.mxu0 0.0
  %79 = vmatprep.subr.mxu0 0.0
  %80 = vmatpush1.msra.mxu0 0.0
  %81 = vmatprep.subr.mxu0 0.0
  %82 = vmatpush1.msra.mxu0 0.0
  %83 = vmatprep.subr.mxu0 0.0
  %84 = vmatpush1.msra.mxu0 0.0
  %85 = vmatprep.subr.mxu0 0.0
  %86 = vmatpush1.msra.mxu0 0.0
  %87 = vmatprep.subr.mxu0 0.0
  %88 = vmatpush1.msra.mxu0 0.0
  %89 = vmatprep.subr.mxu0 0.0
  %90 = vmatpush1.msra.mxu0 0.0
  %91 = vmatprep.subr.mxu0 0.0
  %92 = vmatpush1.msra.mxu0 0.0
  %93 = vmatprep.subr.mxu0 0.0
  %94 = vmatpush1.msra.mxu0 0.0
  %95 = vmatprep.subr.mxu0 0.0
  %96 = vmatpush1.msra.mxu0 0.0
  %97 = vmatprep.subr.mxu0 0.0
  %98 = vmatpush1.msra.mxu0 0.0
  %99 = vmatprep.subr.mxu0 0.0
  %100 = vmatpush1.msra.mxu0 0.0
  %101 = vmatprep.subr.mxu0 0.0
  %102 = vmatpush1.msra.mxu0 0.0
  %103 = vmatprep.subr.mxu0 0.0
  %104 = vmatpush1.msra.mxu0 0.0
  %105 = vmatprep.mubr.f32.mxu0 0.0
  %106 = vmatmul.mubr.f32.gmra.mrb[0].mxu0 %v36
  %v107 = vpop.f32.mrb[0].mxu0
  %v108 = vadd.f32 0.0, %v107
  %v109 = vpop.f32.mrb[0].mxu0
  %110 = vmatprep.mubr.f32.mxu0 0.0
  %111 = vmatmul.mubr.f32.gmra.mrb[0].mxu0 %v39
  %v112 = vpop.f32.mrb[0].mxu0
  %v113 = vadd.f32 0.0, %v112
  %v114 = vpop.f32.mrb[0].mxu0
  %115 = vdwg.mxu0
  %117 = vset.pattern.permute.xlu0 1
  %118 = vperm.xlu0 %117, %v30
  %v119 = vpop.permute.xlu0 %118
  %122 = vset.pattern.permute.xlu0 1
  %123 = vperm.xlu0 %122, %v31
  %v124 = vpop.permute.xlu0 %123
  %v126 = vmul.f32 %v119, %v108
  %v127 = vmul.f32 %v124, %v113
  %v128 = vld [vmem:[%s4] sm:$0xff]
  %v129 = vld [vmem:[%s4 + $0x8] sm:$0xff]
  %v130 = vld [vmem:[%s4 + $0x10] sm:$0xff]
  %v131 = vld [vmem:[%s4 + $0x18] sm:$0xff]
  %v132 = vld [vmem:[%s2] sm:$0xff]
  %v133 = vld [vmem:[%s2 + $0x8] sm:$0xff]
  %v134 = vld [vmem:[%s5] sm:$0xff]
  %v135 = vld [vmem:[%s5 + $0x8] sm:$0xff]
  %v136 = vld [vmem:[%s5 + $0x10] sm:$0xff]
  %v137 = vld [vmem:[%s5 + $0x18] sm:$0xff]
  %vm138 = vcmask 261120
  %v140 = vsel %vm138, %v132, 0
  %v143 = vsel %vm138, %v133, 0
  %145 = vmatprep.subr.mxu0 0.0
  %146 = vmatpush1.msra.mxu0 %v134
  %147 = vmatprep.subr.mxu0 0.0
  %148 = vmatpush1.msra.mxu0 %v135
  %149 = vmatprep.subr.mxu0 0.0
  %150 = vmatpush1.msra.mxu0 %v136
  %151 = vmatprep.subr.mxu0 0.0
  %152 = vmatpush1.msra.mxu0 %v137
  %153 = vmatprep.subr.mxu0 0.0
  %154 = vmatpush1.msra.mxu0 0.0
  %155 = vmatprep.subr.mxu0 0.0
  %156 = vmatpush1.msra.mxu0 0.0
  %157 = vmatprep.subr.mxu0 0.0
  %158 = vmatpush1.msra.mxu0 0.0
  %159 = vmatprep.subr.mxu0 0.0
  %160 = vmatpush1.msra.mxu0 0.0
  %161 = vmatprep.subr.mxu0 0.0
  %162 = vmatpush1.msra.mxu0 0.0
  %163 = vmatprep.subr.mxu0 0.0
  %164 = vmatpush1.msra.mxu0 0.0
  %165 = vmatprep.subr.mxu0 0.0
  %166 = vmatpush1.msra.mxu0 0.0
  %167 = vmatprep.subr.mxu0 0.0
  %168 = vmatpush1.msra.mxu0 0.0
  %169 = vmatprep.subr.mxu0 0.0
  %170 = vmatpush1.msra.mxu0 0.0
  %171 = vmatprep.subr.mxu0 0.0
  %172 = vmatpush1.msra.mxu0 0.0
  %173 = vmatprep.subr.mxu0 0.0
  %174 = vmatpush1.msra.mxu0 0.0
  %175 = vmatprep.subr.mxu0 0.0
  %176 = vmatpush1.msra.mxu0 0.0
  %177 = vmatprep.subr.mxu0 0.0
  %178 = vmatpush1.msra.mxu0 0.0
  %179 = vmatprep.subr.mxu0 0.0
  %180 = vmatpush1.msra.mxu0 0.0
  %181 = vmatprep.subr.mxu0 0.0
  %182 = vmatpush1.msra.mxu0 0.0
  %183 = vmatprep.subr.mxu0 0.0
  %184 = vmatpush1.msra.mxu0 0.0
  %185 = vmatprep.subr.mxu0 0.0
  %186 = vmatpush1.msra.mxu0 0.0
  %187 = vmatprep.subr.mxu0 0.0
  %188 = vmatpush1.msra.mxu0 0.0
  %189 = vmatprep.subr.mxu0 0.0
  %190 = vmatpush1.msra.mxu0 0.0
  %191 = vmatprep.subr.mxu0 0.0
  %192 = vmatpush1.msra.mxu0 0.0
  %193 = vmatprep.subr.mxu0 0.0
  %194 = vmatpush1.msra.mxu0 0.0
  %195 = vmatprep.subr.mxu0 0.0
  %196 = vmatpush1.msra.mxu0 0.0
  %197 = vmatprep.subr.mxu0 0.0
  %198 = vmatpush1.msra.mxu0 0.0
  %199 = vmatprep.subr.mxu0 0.0
  %200 = vmatpush1.msra.mxu0 0.0
  %201 = vmatprep.subr.mxu0 0.0
  %202 = vmatpush1.msra.mxu0 0.0
  %203 = vmatprep.subr.mxu0 0.0
  %204 = vmatpush1.msra.mxu0 0.0
  %205 = vmatprep.subr.mxu0 0.0
  %206 = vmatpush1.msra.mxu0 0.0
  %207 = vmatprep.subr.mxu0 0.0
  %208 = vmatpush1.msra.mxu0 0.0
  %209 = vmatprep.mubr.f32.mxu0 0.0
  %210 = vmatmul.mubr.f32.gmra.mrb[0].mxu0 %v140
  %v211 = vpop.f32.mrb[0].mxu0
  %v212 = vadd.f32 0.0, %v211
  %v213 = vpop.f32.mrb[0].mxu0
  %214 = vmatprep.mubr.f32.mxu0 0.0
  %215 = vmatmul.mubr.f32.gmra.mrb[0].mxu0 %v143
  %v216 = vpop.f32.mrb[0].mxu0
  %v217 = vadd.f32 0.0, %v216
  %v218 = vpop.f32.mrb[0].mxu0
  %219 = vdwg.mxu0
  %v221 = vsel %vm138, %v126, 0
  %v224 = vsel %vm138, %v127, 0
  %226 = vmatprep.subr.mxu0 0.0
  %227 = vmatpush1.msra.mxu0 %v128
  %228 = vmatprep.subr.mxu0 0.0
  %229 = vmatpush1.msra.mxu0 %v129
  %230 = vmatprep.subr.mxu0 0.0
  %231 = vmatpush1.msra.mxu0 %v130
  %232 = vmatprep.subr.mxu0 0.0
  %233 = vmatpush1.msra.mxu0 %v131
  %234 = vmatprep.subr.mxu0 0.0
  %235 = vmatpush1.msra.mxu0 0.0
  %236 = vmatprep.subr.mxu0 0.0
  %237 = vmatpush1.msra.mxu0 0.0
  %238 = vmatprep.subr.mxu0 0.0
  %239 = vmatpush1.msra.mxu0 0.0
  %240 = vmatprep.subr.mxu0 0.0
  %241 = vmatpush1.msra.mxu0 0.0
  %242 = vmatprep.subr.mxu0 0.0
  %243 = vmatpush1.msra.mxu0 0.0
  %244 = vmatprep.subr.mxu0 0.0
  %245 = vmatpush1.msra.mxu0 0.0
  %246 = vmatprep.subr.mxu0 0.0
  %247 = vmatpush1.msra.mxu0 0.0
  %248 = vmatprep.subr.mxu0 0.0
  %249 = vmatpush1.msra.mxu0 0.0
  %250 = vmatprep.subr.mxu0 0.0
  %251 = vmatpush1.msra.mxu0 0.0
  %252 = vmatprep.subr.mxu0 0.0
  %253 = vmatpush1.msra.mxu0 0.0
  %254 = vmatprep.subr.mxu0 0.0
  %255 = vmatpush1.msra.mxu0 0.0
  %256 = vmatprep.subr.mxu0 0.0
  %257 = vmatpush1.msra.mxu0 0.0
  %258 = vmatprep.subr.mxu0 0.0
  %259 = vmatpush1.msra.mxu0 0.0
  %260 = vmatprep.subr.mxu0 0.0
  %261 = vmatpush1.msra.mxu0 0.0
  %262 = vmatprep.subr.mxu0 0.0
  %263 = vmatpush1.msra.mxu0 0.0
  %264 = vmatprep.subr.mxu0 0.0
  %265 = vmatpush1.msra.mxu0 0.0
  %266 = vmatprep.subr.mxu0 0.0
  %267 = vmatpush1.msra.mxu0 0.0
  %268 = vmatprep.subr.mxu0 0.0
  %269 = vmatpush1.msra.mxu0 0.0
  %270 = vmatprep.subr.mxu0 0.0
  %271 = vmatpush1.msra.mxu0 0.0
  %272 = vmatprep.subr.mxu0 0.0
  %273 = vmatpush1.msra.mxu0 0.0
  %274 = vmatprep.subr.mxu0 0.0
  %275 = vmatpush1.msra.mxu0 0.0
  %276 = vmatprep.subr.mxu0 0.0
  %277 = vmatpush1.msra.mxu0 0.0
  %278 = vmatprep.subr.mxu0 0.0
  %279 = vmatpush1.msra.mxu0 0.0
  %280 = vmatprep.subr.mxu0 0.0
  %281 = vmatpush1.msra.mxu0 0.0
  %282 = vmatprep.subr.mxu0 0.0
  %283 = vmatpush1.msra.mxu0 0.0
  %284 = vmatprep.subr.mxu0 0.0
  %285 = vmatpush1.msra.mxu0 0.0
  %286 = vmatprep.subr.mxu0 0.0
  %287 = vmatpush1.msra.mxu0 0.0
  %288 = vmatprep.subr.mxu0 0.0
  %289 = vmatpush1.msra.mxu0 0.0
  %290 = vmatprep.mubr.f32.mxu0 0.0
  %291 = vmatmul.mubr.f32.gmra.mrb[0].mxu0 %v221
  %v292 = vpop.f32.mrb[0].mxu0
  %v293 = vadd.f32 %v212, %v292
  %v294 = vpop.f32.mrb[0].mxu0
  %295 = vmatprep.mubr.f32.mxu0 0.0
  %296 = vmatmul.mubr.f32.gmra.mrb[0].mxu0 %v224
  %v297 = vpop.f32.mrb[0].mxu0
  %v298 = vadd.f32 %v217, %v297
  %v299 = vpop.f32.mrb[0].mxu0
  %300 = vdwg.mxu0
  %v301 = vld [vmem:[%s6] sm:$0x1]
  %v303 = vlaneseq
  %v304 = vshrl.u32 %v303, 7
  %v305 = vsub.s32 0, %v304
  %v306 = vrot.slane %v301, %v305
  %v308 = vadd.f32 %v293, %v306
  %v309 = vadd.f32 %v298, %v306
  %v310 = vmax.f32 %v308, 0.0
  %v311 = vmax.f32 %v309, 0.0
  %312 = vset.pattern.permute.xlu0 0
  %313 = vperm.xlu0 %312, %v30
  %v314 = vpop.permute.xlu0 %313
  %316 = vset.pattern.permute.xlu0 0
  %317 = vperm.xlu0 %316, %v31
  %v318 = vpop.permute.xlu0 %317
  %v320 = vmul.f32 %v314, %v310
  %v321 = vmul.f32 %v318, %v311
  %322 = vst.msk [vmem:[%s7] sm:$0xff] %vm138, %v320
  %323 = vst.msk [vmem:[%s7 + $0x8] sm:$0xff] %vm138, %v321
  // Predicated region
  $region30: #{gnn_routing_forward.4} parent=0 // pred_check
    _
  $region31: #{gnn_routing_forward.4} parent=0 // pred_check_branch
    %325 = sbr.rel (0) target = $region33
  $region32: #{gnn_routing_forward.4} parent=0 // pred_region
    _
  $region33: #{gnn_routing_forward.4} parent=0 // pred_fallthru
    _
  // Predicated region
  $region34: #{gnn_routing_forward.4} parent=0 // pred_check
    _
  $region35: #{gnn_routing_forward.4} parent=0 // pred_check_branch
    %327 = sbr.rel (0) target = $region37
  $region36: #{gnn_routing_forward.4} parent=0 // pred_region
    _
  $region37: #{gnn_routing_forward.4} parent=0 // pred_fallthru
    _

// kernel: gnn_routing_forward.5
$region0: #{gnn_routing_forward.5}
  #allocation0 [shape = 'u32[]', space=smem, size = 0x4, offset = 0x4, fixed_abs, tag = 'smem constant byte address 0x4 - core index']
  #allocation1 [shape = 'u32[144,128]{1,0:T(1,128)}', space=vmem, size = 0x12000, scoped, tag = 'internal scratch']
  %s0 = inlined_call_operand.vmem [shape: bf16[16,16], index: 0, kind: input, shape index: {}]
  %s1 = inlined_call_operand.vmem [shape: f32[16,32], index: 1, kind: input, shape index: {}, may-alias: {1,2}]
  %s2 = inlined_call_operand.vmem [shape: f32[16,32], index: 2, kind: input, shape index: {}, may-alias: {1,2}]
  %s3 = inlined_call_operand.vmem [shape: f32[16,2], index: 3, kind: input, shape index: {}]
  %s4 = inlined_call_operand.vmem [shape: f32[32,128], index: 4, kind: input, shape index: {}]
  %s5 = inlined_call_operand.vmem [shape: f32[1,128], index: 5, kind: input, shape index: {}]
  %s6 = inlined_call_operand.vmem [shape: f32[16,128], index: 6, kind: output, shape index: {}]
  %s7 = sld [smem:[#allocation0]]
  $region34: #{gnn_routing_forward.5} parent=0
    _
  %s9 = ssub.s32 1, %s7
  %s10 = scalar_select 0, %s9, %s7
  // Predicated region
  $region2: #{gnn_routing_forward.5} parent=0 // pred_check
    _
  $region3: #{gnn_routing_forward.5} parent=0 // pred_check_branch
    %12 = sbr.rel (0) target = $region5
  $region4: #{gnn_routing_forward.5} parent=0 // pred_region
    _
  $region5: #{gnn_routing_forward.5} parent=0 // pred_fallthru
    _
  // Predicated region
  $region6: #{gnn_routing_forward.5} parent=0 // pred_check
    _
  $region7: #{gnn_routing_forward.5} parent=0 // pred_check_branch
    %14 = sbr.rel (0) target = $region9
  $region8: #{gnn_routing_forward.5} parent=0 // pred_region
    _
  $region9: #{gnn_routing_forward.5} parent=0 // pred_fallthru
    _
  // Predicated region
  $region10: #{gnn_routing_forward.5} parent=0 // pred_check
    _
  $region11: #{gnn_routing_forward.5} parent=0 // pred_check_branch
    %16 = sbr.rel (0) target = $region13
  $region12: #{gnn_routing_forward.5} parent=0 // pred_region
    _
  $region13: #{gnn_routing_forward.5} parent=0 // pred_fallthru
    _
  // Predicated region
  $region14: #{gnn_routing_forward.5} parent=0 // pred_check
    _
  $region15: #{gnn_routing_forward.5} parent=0 // pred_check_branch
    %18 = sbr.rel (0) target = $region17
  $region16: #{gnn_routing_forward.5} parent=0 // pred_region
    _
  $region17: #{gnn_routing_forward.5} parent=0 // pred_fallthru
    _
  // Predicated region
  $region18: #{gnn_routing_forward.5} parent=0 // pred_check
    _
  $region19: #{gnn_routing_forward.5} parent=0 // pred_check_branch
    %20 = sbr.rel (0) target = $region21
  $region20: #{gnn_routing_forward.5} parent=0 // pred_region
    _
  $region21: #{gnn_routing_forward.5} parent=0 // pred_fallthru
    _
  // Predicated region
  $region22: #{gnn_routing_forward.5} parent=0 // pred_check
    _
  $region23: #{gnn_routing_forward.5} parent=0 // pred_check_branch
    %22 = sbr.rel (0) target = $region25
  $region24: #{gnn_routing_forward.5} parent=0 // pred_region
    _
  $region25: #{gnn_routing_forward.5} parent=0 // pred_fallthru
    _
  %v23 = vld [vmem:[%s0] sm:$0xf]
  %v24 = vld [vmem:[%s0 + $0x4] sm:$0xf]
  %v25 = vunpack.c.l.bf16 %v23
  %v26 = vunpack.c.l.bf16 %v24
  %v27 = vld [vmem:[%s3] sm:$0xff]
  %v28 = vld [vmem:[%s3 + $0x8] sm:$0xff]
  %v29 = vld [vmem:[%s1] sm:$0xff]
  %v30 = vld [vmem:[%s1 + $0x8] sm:$0xff]
  %v31 = vld [vmem:[%s2] sm:$0xff]
  %v32 = vld [vmem:[%s2 + $0x8] sm:$0xff]
  %vm33 = vcmask 130048
  %v35 = vsel %vm33, %v25, 0
  %v38 = vsel %vm33, %v26, 0
  %40 = vmatprep.subr.mxu0 0.0
  %41 = vmatpush1.msra.mxu0 %v29
  %42 = vmatprep.subr.mxu0 0.0
  %43 = vmatpush1.msra.mxu0 %v30
  %44 = vmatprep.subr.mxu0 0.0
  %45 = vmatpush1.msra.mxu0 0.0
  %46 = vmatprep.subr.mxu0 0.0
  %47 = vmatpush1.msra.mxu0 0.0
  %48 = vmatprep.subr.mxu0 0.0
  %49 = vmatpush1.msra.mxu0 0.0
  %50 = vmatprep.subr.mxu0 0.0
  %51 = vmatpush1.msra.mxu0 0.0
  %52 = vmatprep.subr.mxu0 0.0
  %53 = vmatpush1.msra.mxu0 0.0
  %54 = vmatprep.subr.mxu0 0.0
  %55 = vmatpush1.msra.mxu0 0.0
  %56 = vmatprep.subr.mxu0 0.0
  %57 = vmatpush1.msra.mxu0 0.0
  %58 = vmatprep.subr.mxu0 0.0
  %59 = vmatpush1.msra.mxu0 0.0
  %60 = vmatprep.subr.mxu0 0.0
  %61 = vmatpush1.msra.mxu0 0.0
  %62 = vmatprep.subr.mxu0 0.0
  %63 = vmatpush1.msra.mxu0 0.0
  %64 = vmatprep.subr.mxu0 0.0
  %65 = vmatpush1.msra.mxu0 0.0
  %66 = vmatprep.subr.mxu0 0.0
  %67 = vmatpush1.msra.mxu0 0.0
  %68 = vmatprep.subr.mxu0 0.0
  %69 = vmatpush1.msra.mxu0 0.0
  %70 = vmatprep.subr.mxu0 0.0
  %71 = vmatpush1.msra.mxu0 0.0
  %72 = vmatprep.subr.mxu0 0.0
  %73 = vmatpush1.msra.mxu0 0.0
  %74 = vmatprep.subr.mxu0 0.0
  %75 = vmatpush1.msra.mxu0 0.0
  %76 = vmatprep.subr.mxu0 0.0
  %77 = vmatpush1.msra.mxu0 0.0
  %78 = vmatprep.subr.mxu0 0.0
  %79 = vmatpush1.msra.mxu0 0.0
  %80 = vmatprep.subr.mxu0 0.0
  %81 = vmatpush1.msra.mxu0 0.0
  %82 = vmatprep.subr.mxu0 0.0
  %83 = vmatpush1.msra.mxu0 0.0
  %84 = vmatprep.subr.mxu0 0.0
  %85 = vmatpush1.msra.mxu0 0.0
  %86 = vmatprep.subr.mxu0 0.0
  %87 = vmatpush1.msra.mxu0 0.0
  %88 = vmatprep.subr.mxu0 0.0
  %89 = vmatpush1.msra.mxu0 0.0
  %90 = vmatprep.subr.mxu0 0.0
  %91 = vmatpush1.msra.mxu0 0.0
  %92 = vmatprep.subr.mxu0 0.0
  %93 = vmatpush1.msra.mxu0 0.0
  %94 = vmatprep.subr.mxu0 0.0
  %95 = vmatpush1.msra.mxu0 0.0
  %96 = vmatprep.subr.mxu0 0.0
  %97 = vmatpush1.msra.mxu0 0.0
  %98 = vmatprep.subr.mxu0 0.0
  %99 = vmatpush1.msra.mxu0 0.0
  %100 = vmatprep.subr.mxu0 0.0
  %101 = vmatpush1.msra.mxu0 0.0
  %102 = vmatprep.subr.mxu0 0.0
  %103 = vmatpush1.msra.mxu0 0.0
  %104 = vmatprep.mubr.f32.mxu0 0.0
  %105 = vmatmul.mubr.f32.gmra.mrb[0].mxu0 %v35
  %v106 = vpop.f32.mrb[0].mxu0
  %v107 = vadd.f32 %v31, %v106
  %v108 = vpop.f32.mrb[0].mxu0
  %109 = vmatprep.mubr.f32.mxu0 0.0
  %110 = vmatmul.mubr.f32.gmra.mrb[0].mxu0 %v38
  %v111 = vpop.f32.mrb[0].mxu0
  %v112 = vadd.f32 %v32, %v111
  %v113 = vpop.f32.mrb[0].mxu0
  %114 = vdwg.mxu0
  %116 = vset.pattern.permute.xlu0 0
  %117 = vperm.xlu0 %116, %v27
  %v118 = vpop.permute.xlu0 %117
  %121 = vset.pattern.permute.xlu0 0
  %122 = vperm.xlu0 %121, %v28
  %v123 = vpop.permute.xlu0 %122
  %v125 = vmul.f32 %v118, %v107
  %v126 = vmul.f32 %v123, %v112
  %v127 = vld [vmem:[%s4] sm:$0xff]
  %v128 = vld [vmem:[%s4 + $0x8] sm:$0xff]
  %v129 = vld [vmem:[%s4 + $0x10] sm:$0xff]
  %v130 = vld [vmem:[%s4 + $0x18] sm:$0xff]
  %v131 = vld [vmem:[%s5] sm:$0x1]
  %v133 = vlaneseq
  %v134 = vshrl.u32 %v133, 7
  %v135 = vsub.s32 0, %v134
  %v136 = vrot.slane %v131, %v135
  %vm138 = vcmask 261120
  %v140 = vsel %vm138, %v125, 0
  %v143 = vsel %vm138, %v126, 0
  %145 = vmatprep.subr.mxu0 0.0
  %146 = vmatpush1.msra.mxu0 %v127
  %147 = vmatprep.subr.mxu0 0.0
  %148 = vmatpush1.msra.mxu0 %v128
  %149 = vmatprep.subr.mxu0 0.0
  %150 = vmatpush1.msra.mxu0 %v129
  %151 = vmatprep.subr.mxu0 0.0
  %152 = vmatpush1.msra.mxu0 %v130
  %153 = vmatprep.subr.mxu0 0.0
  %154 = vmatpush1.msra.mxu0 0.0
  %155 = vmatprep.subr.mxu0 0.0
  %156 = vmatpush1.msra.mxu0 0.0
  %157 = vmatprep.subr.mxu0 0.0
  %158 = vmatpush1.msra.mxu0 0.0
  %159 = vmatprep.subr.mxu0 0.0
  %160 = vmatpush1.msra.mxu0 0.0
  %161 = vmatprep.subr.mxu0 0.0
  %162 = vmatpush1.msra.mxu0 0.0
  %163 = vmatprep.subr.mxu0 0.0
  %164 = vmatpush1.msra.mxu0 0.0
  %165 = vmatprep.subr.mxu0 0.0
  %166 = vmatpush1.msra.mxu0 0.0
  %167 = vmatprep.subr.mxu0 0.0
  %168 = vmatpush1.msra.mxu0 0.0
  %169 = vmatprep.subr.mxu0 0.0
  %170 = vmatpush1.msra.mxu0 0.0
  %171 = vmatprep.subr.mxu0 0.0
  %172 = vmatpush1.msra.mxu0 0.0
  %173 = vmatprep.subr.mxu0 0.0
  %174 = vmatpush1.msra.mxu0 0.0
  %175 = vmatprep.subr.mxu0 0.0
  %176 = vmatpush1.msra.mxu0 0.0
  %177 = vmatprep.subr.mxu0 0.0
  %178 = vmatpush1.msra.mxu0 0.0
  %179 = vmatprep.subr.mxu0 0.0
  %180 = vmatpush1.msra.mxu0 0.0
  %181 = vmatprep.subr.mxu0 0.0
  %182 = vmatpush1.msra.mxu0 0.0
  %183 = vmatprep.subr.mxu0 0.0
  %184 = vmatpush1.msra.mxu0 0.0
  %185 = vmatprep.subr.mxu0 0.0
  %186 = vmatpush1.msra.mxu0 0.0
  %187 = vmatprep.subr.mxu0 0.0
  %188 = vmatpush1.msra.mxu0 0.0
  %189 = vmatprep.subr.mxu0 0.0
  %190 = vmatpush1.msra.mxu0 0.0
  %191 = vmatprep.subr.mxu0 0.0
  %192 = vmatpush1.msra.mxu0 0.0
  %193 = vmatprep.subr.mxu0 0.0
  %194 = vmatpush1.msra.mxu0 0.0
  %195 = vmatprep.subr.mxu0 0.0
  %196 = vmatpush1.msra.mxu0 0.0
  %197 = vmatprep.subr.mxu0 0.0
  %198 = vmatpush1.msra.mxu0 0.0
  %199 = vmatprep.subr.mxu0 0.0
  %200 = vmatpush1.msra.mxu0 0.0
  %201 = vmatprep.subr.mxu0 0.0
  %202 = vmatpush1.msra.mxu0 0.0
  %203 = vmatprep.subr.mxu0 0.0
  %204 = vmatpush1.msra.mxu0 0.0
  %205 = vmatprep.subr.mxu0 0.0
  %206 = vmatpush1.msra.mxu0 0.0
  %207 = vmatprep.subr.mxu0 0.0
  %208 = vmatpush1.msra.mxu0 0.0
  %209 = vmatprep.mubr.f32.mxu0 0.0
  %210 = vmatmul.mubr.f32.gmra.mrb[0].mxu0 %v140
  %v211 = vpop.f32.mrb[0].mxu0
  %v212 = vadd.f32 %v136, %v211
  %v213 = vpop.f32.mrb[0].mxu0
  %214 = vmatprep.mubr.f32.mxu0 0.0
  %215 = vmatmul.mubr.f32.gmra.mrb[0].mxu0 %v143
  %v216 = vpop.f32.mrb[0].mxu0
  %v217 = vadd.f32 %v136, %v216
  %v218 = vpop.f32.mrb[0].mxu0
  %219 = vdwg.mxu0
  %220 = vst [vmem:[%s6] sm:$0xff] %v212
  %221 = vst [vmem:[%s6 + $0x8] sm:$0xff] %v217
  // Predicated region
  $region26: #{gnn_routing_forward.5} parent=0 // pred_check
    _
  $region27: #{gnn_routing_forward.5} parent=0 // pred_check_branch
    %223 = sbr.rel (0) target = $region29
  $region28: #{gnn_routing_forward.5} parent=0 // pred_region
    _
  $region29: #{gnn_routing_forward.5} parent=0 // pred_fallthru
    _
  // Predicated region
  $region30: #{gnn_routing_forward.5} parent=0 // pred_check
    _
  $region31: #{gnn_routing_forward.5} parent=0 // pred_check_branch
    %225 = sbr.rel (0) target = $region33
  $region32: #{gnn_routing_forward.5} parent=0 // pred_region
    _
  $region33: #{gnn_routing_forward.5} parent=0 // pred_fallthru
    _

</llo_original>
